<compile_context>
chip_gen: v7x
topology: tpu7x:2x2x1
jax: 0.10.0
libtpu: 0.0.40
codegen_flags: <defaults>
</compile_context>

<pallas_src>
from functools import partial

import jax
import jax.numpy as jnp
from jax import lax
from jax.experimental import pallas as pl
from jax.experimental.pallas import tpu as pltpu


def _round_up(n, k):
    return ((n + k - 1) // k) * k


def _clip_relu(v, tau, m):
    # ClipReLu: 0 if v <= tau; v - tau if tau < v <= tau + m; m if v > tau + m
    return jnp.clip(v - tau, 0.0, m)


def deepnet_kernel(x_ref, w_in_ref, b_in_ref, w_mid_ref, b_mid_ref,
                   w_out_ref, b_out_ref, o_ref, *, n_middle, m):
    """One batch tile of the fused DeepNet forward.

    b_in / b_mid arrive with tau already folded in (b - tau), so each
    ClipReLu is just clip(z + bias, 0, m). Matmul operands may be bf16;
    accumulation and all elementwise math stay f32. Bias adds broadcast
    directly from the (1, mid) refs (no materialized (tile_b, mid) tiles).
    """
    cdt = w_in_ref.dtype  # matmul operand dtype (f32 or bf16)

    # ---- input layer: Linear + ClipReLu ----
    h = jnp.dot(x_ref[...].astype(cdt), w_in_ref[...],
                preferred_element_type=jnp.float32)
    h = jnp.clip(h + b_in_ref[...], 0.0, m)

    # ---- n_middle shared middle layers: Linear + ClipReLu ----
    w_mid = w_mid_ref[...]
    b_mid = b_mid_ref[...]

    def body(_, h):
        z = jnp.dot(h.astype(cdt), w_mid, preferred_element_type=jnp.float32)
        return jnp.clip(z + b_mid, 0.0, m)

    # Small static trip count -> unroll for LLO scheduler visibility.
    h = lax.fori_loop(0, n_middle, body, h, unroll=True)

    # ---- output layer: Linear (no activation), unpadded feature store ----
    out = jnp.dot(h.astype(cdt), w_out_ref[...],
                  preferred_element_type=jnp.float32)
    o_ref[...] = (out + b_out_ref[...]).astype(o_ref.dtype)


def deepnet_forward(x, params, *, n_middle, tau, m, tile_b=2048,
                    weights_dtype=jnp.float32, out_dtype=None):
    """x: [batch, input_size]. Returns [batch, output_size] in out_dtype
    (defaults to x.dtype). Pass bf16 x / out_dtype to halve streamed bytes."""
    w_in, b_in, w_mid, b_mid, w_out, b_out = params
    batch, in_size = x.shape
    mid = w_in.shape[1]
    out_size = w_out.shape[1]
    out_dtype = out_dtype or x.dtype

    # Pad the hidden dim to a lane-dense multiple of 128. Zero pads are
    # numerically inert: padded W_in columns give h_pad = clip(0 + 0) = 0 and
    # padded W_mid / W_out rows are zero, so pads never leak into real outputs.
    mid_p = _round_up(mid, 128)

    # Fold tau into input/middle biases so the in-kernel clip is clip(z, 0, m).
    b_in_f = b_in.reshape(1, -1).astype(jnp.float32) - tau
    b_mid_f = b_mid.reshape(1, -1).astype(jnp.float32) - tau

    w_in_p = jnp.zeros((in_size, mid_p), jnp.float32).at[:, :mid].set(
        w_in.astype(jnp.float32))
    w_mid_p = jnp.zeros((mid_p, mid_p), jnp.float32).at[:mid, :mid].set(
        w_mid.astype(jnp.float32))
    w_out_p = jnp.zeros((mid_p, out_size), jnp.float32).at[:mid, :].set(
        w_out.astype(jnp.float32))
    b_in_p = jnp.zeros((1, mid_p), jnp.float32).at[:, :mid].set(b_in_f)
    b_mid_p = jnp.zeros((1, mid_p), jnp.float32).at[:, :mid].set(b_mid_f)
    b_out_p = b_out.reshape(1, -1).astype(jnp.float32)

    # Matmul-operand dtype (bf16 halves resident weight VMEM/HBM; f32 default
    # so v5e pays no per-layer cast overhead — astype is a no-op at f32).
    w_in_c = w_in_p.astype(weights_dtype)
    w_mid_c = w_mid_p.astype(weights_dtype)
    w_out_c = w_out_p.astype(weights_dtype)

    # Batch tiling: big tiles amortize ~0.35us/step overhead and keep the
    # streaming DMAs long; force >= 2 grid steps when the batch allows so the
    # "parallel" axis actually shards across v7x's two TensorCores.
    batch8 = _round_up(batch, 8)
    tile_b = max(8, _round_up(tile_b, 8))
    tile_b = min(tile_b, batch8)
    if batch8 >= 16 and batch8 // tile_b < 2:
        tile_b = max(8, _round_up(batch8 // 2, 8))
    padded_batch = _round_up(batch, tile_b)
    if padded_batch != batch:
        x = jnp.zeros((padded_batch, in_size), x.dtype).at[:batch].set(x)
    grid = (padded_batch // tile_b,)

    # Advisory cost estimate for XLA's scheduler (consistent padded sizes).
    wsz = jnp.dtype(weights_dtype).itemsize
    xsz = jnp.dtype(x.dtype).itemsize
    osz = jnp.dtype(out_dtype).itemsize
    weight_bytes = (in_size * mid_p + mid_p * mid_p + mid_p * out_size) * wsz
    bias_bytes = (2 * mid_p + out_size) * 4
    flops = 2 * padded_batch * (in_size * mid_p + n_middle * mid_p * mid_p
                                + mid_p * out_size)
    cost = pl.CostEstimate(
        flops=flops, transcendentals=0,
        bytes_accessed=int(padded_batch * in_size * xsz
                           + padded_batch * out_size * osz
                           + weight_bytes + bias_bytes))

    # VMEM budget: double-buffered x/out tiles, (conservatively 2x) resident
    # weights/biases, plus live activation temporaries from the unrolled loop.
    vmem_needed = (2 * tile_b * in_size * xsz
                   + 2 * tile_b * out_size * osz
                   + 2 * (weight_bytes + bias_bytes)
                   + 4 * tile_b * mid_p * 4)
    compiler_kwargs = dict(dimension_semantics=("parallel",))
    if vmem_needed > 16 * 1024 * 1024:
        compiler_kwargs["vmem_limit_bytes"] = int(
            min(int(1.5 * vmem_needed), 48 * 1024 * 1024))

    in_specs = [
        pl.BlockSpec((tile_b, in_size), lambda i: (i, 0)),   # x: batch-tiled
        pl.BlockSpec((in_size, mid_p), lambda i: (0, 0)),    # W_in: resident
        pl.BlockSpec((1, mid_p), lambda i: (0, 0)),          # b_in - tau
        pl.BlockSpec((mid_p, mid_p), lambda i: (0, 0)),      # W_mid: resident
        pl.BlockSpec((1, mid_p), lambda i: (0, 0)),          # b_mid - tau
        pl.BlockSpec((mid_p, out_size), lambda i: (0, 0)),   # W_out: resident
        pl.BlockSpec((1, out_size), lambda i: (0, 0)),       # b_out
    ]
    # Unpadded output feature dim: block last dim == full array dim is legal
    # and keeps the per-row writeback at out_size elements (no 16x inflation).
    out_specs = pl.BlockSpec((tile_b, out_size), lambda i: (i, 0))

    out = pl.pallas_call(
        partial(deepnet_kernel, n_middle=n_middle, m=m),
        out_shape=jax.ShapeDtypeStruct((padded_batch, out_size), out_dtype),
        grid=grid,
        in_specs=in_specs,
        out_specs=out_specs,
        compiler_params=pltpu.CompilerParams(**compiler_kwargs),
        cost_estimate=cost,
    )(x, w_in_c, b_in_p, w_mid_c, b_mid_p, w_out_c, b_out_p)

    return out[:batch]


def deepnet_reference(x, params, *, n_middle, tau, m):
    w_in, b_in, w_mid, b_mid, w_out, b_out = params
    h = _clip_relu(x @ w_in + b_in, tau, m)
    for _ in range(n_middle):
        h = _clip_relu(h @ w_mid + b_mid, tau, m)
    return h @ w_out + b_out


def _xavier(key, fan_in, fan_out):
    limit = jnp.sqrt(6.0 / (fan_in + fan_out))
    return jax.random.uniform(key, (fan_in, fan_out), jnp.float32, -limit, limit)


if __name__ == "__main__":
    # DeepNet(input_size=32, output_size=8, middle_layer_size=64,
    #         n_middle_layers=3, tau=0.1, m=1.0)
    batch, C, H, W = 2, 2, 4, 4
    input_size = C * H * W        # forward flattens x: x.reshape(x.size(0), -1)
    middle_layer_size = 64
    output_size = 8
    n_middle_layers = 3
    tau, m = 0.1, 1.0

    key = jax.random.PRNGKey(0)
    kx, k1, k2, k3, k4, k5, k6 = jax.random.split(key, 7)

    x4d = jax.random.normal(kx, (batch, C, H, W), jnp.float32)   # NCHW input
    x = x4d.reshape(batch, -1)

    params = (
        _xavier(k1, input_size, middle_layer_size),                         # W_in
        0.01 * jax.random.normal(k2, (1, middle_layer_size), jnp.float32),  # b_in
        _xavier(k3, middle_layer_size, middle_layer_size),                  # W_mid (shared)
        0.01 * jax.random.normal(k4, (1, middle_layer_size), jnp.float32),  # b_mid
        _xavier(k5, middle_layer_size, output_size),                        # W_out
        0.01 * jax.random.normal(k6, (1, output_size), jnp.float32),        # b_out
    )

    ref = deepnet_reference(x, params, n_middle=n_middle_layers, tau=tau, m=m)

    # f32 path: exact correctness check.
    out = deepnet_forward(x, params, n_middle=n_middle_layers, tau=tau, m=m)
    out = jax.block_until_ready(out)
    assert out.shape == (batch, output_size)
    assert jnp.allclose(out, ref, atol=1e-5, rtol=1e-5)

    # bf16 streaming path (bf16 weights + bf16 x, f32 accumulation): loose check.
    out_bf16 = jax.block_until_ready(
        deepnet_forward(x.astype(jnp.bfloat16), params,
                        n_middle=n_middle_layers, tau=tau, m=m,
                        weights_dtype=jnp.bfloat16, out_dtype=jnp.float32))
    assert jnp.allclose(out_bf16, ref, atol=5e-2, rtol=5e-2)

    # TODO(synk): self_attention=True branch (LinearTransformer /
    # SelfLinearAttention), normalization=True (LayerNorm) and
    # residual_net=True are dead code under the default flags and are not
    # implemented here.
    print("KERNEL_OK")
</pallas_src>

<mosaic_0001>
module attributes {stable_mosaic.version = 11 : i64} {
  func.func @deepnet_kernel(%arg0: i32, %arg1: memref<8x32xf32, #tpu.memory_space<vmem>>, %arg2: memref<32x128xf32, #tpu.memory_space<vmem>>, %arg3: memref<1x128xf32, #tpu.memory_space<vmem>>, %arg4: memref<128x128xf32, #tpu.memory_space<vmem>>, %arg5: memref<1x128xf32, #tpu.memory_space<vmem>>, %arg6: memref<128x8xf32, #tpu.memory_space<vmem>>, %arg7: memref<1x8xf32, #tpu.memory_space<vmem>>, %arg8: memref<8x8xf32, #tpu.memory_space<vmem>>) attributes {dimension_semantics = [#tpu.dimension_semantics<parallel>], iteration_bounds = array<i64: 1>, scalar_prefetch = 0 : i64, scratch_operands = 0 : i64, tpu.core_type = #tpu.core_type<tc>, window_params = [{transform_indices = @transform_0, window_bounds = array<i64: 8, 32>}, {pipeline_mode = #tpu.pipeline_mode<synchronous>, transform_indices = @transform_1, window_bounds = array<i64: 32, 128>}, {pipeline_mode = #tpu.pipeline_mode<synchronous>, transform_indices = @transform_2, window_bounds = array<i64: 1, 128>}, {pipeline_mode = #tpu.pipeline_mode<synchronous>, transform_indices = @transform_3, window_bounds = array<i64: 128, 128>}, {pipeline_mode = #tpu.pipeline_mode<synchronous>, transform_indices = @transform_4, window_bounds = array<i64: 1, 128>}, {pipeline_mode = #tpu.pipeline_mode<synchronous>, transform_indices = @transform_5, window_bounds = array<i64: 128, 8>}, {pipeline_mode = #tpu.pipeline_mode<synchronous>, transform_indices = @transform_6, window_bounds = array<i64: 1, 8>}, {transform_indices = @transform_7, window_bounds = array<i64: 8, 8>}]} {
    %c0 = arith.constant 0 : index
    %c0_0 = arith.constant 0 : index
    %0 = vector.load %arg1[%c0, %c0_0] : memref<8x32xf32, #tpu.memory_space<vmem>>, vector<8x32xf32>
    %c0_1 = arith.constant 0 : index
    %c0_2 = arith.constant 0 : index
    %1 = vector.load %arg2[%c0_1, %c0_2] : memref<32x128xf32, #tpu.memory_space<vmem>>, vector<32x128xf32>
    %cst = arith.constant dense<0.000000e+00> : vector<8x128xf32>
    %2 = tpu.matmul %0, %1, %cst {dimension_numbers = #tpu.dot_dimension_numbers<[1], [0], [0], [1], [0, 0, 1, 1], [], []>} : vector<8x32xf32>, vector<32x128xf32>, vector<8x128xf32> -> vector<8x128xf32>
    %c0_3 = arith.constant 0 : index
    %c0_4 = arith.constant 0 : index
    %3 = vector.load %arg3[%c0_3, %c0_4] : memref<1x128xf32, #tpu.memory_space<vmem>>, vector<1x128xf32>
    %4 = vector.broadcast %3 : vector<1x128xf32> to vector<8x128xf32>
    %5 = arith.addf %2, %4 : vector<8x128xf32>
    %cst_5 = arith.constant 0.000000e+00 : f32
    %cst_6 = arith.constant 1.000000e+00 : f32
    %6 = vector.broadcast %cst_5 : f32 to vector<8x128xf32>
    %7 = arith.maximumf %6, %5 : vector<8x128xf32>
    %8 = vector.broadcast %cst_6 : f32 to vector<8x128xf32>
    %9 = arith.minimumf %8, %7 : vector<8x128xf32>
    %c0_7 = arith.constant 0 : index
    %c0_8 = arith.constant 0 : index
    %10 = vector.load %arg4[%c0_7, %c0_8] : memref<128x128xf32, #tpu.memory_space<vmem>>, vector<128x128xf32>
    %c0_9 = arith.constant 0 : index
    %c0_10 = arith.constant 0 : index
    %11 = vector.load %arg5[%c0_9, %c0_10] : memref<1x128xf32, #tpu.memory_space<vmem>>, vector<1x128xf32>
    %c0_i32 = arith.constant 0 : i32
    %cst_11 = arith.constant dense<0.000000e+00> : vector<8x128xf32>
    %12 = tpu.matmul %9, %10, %cst_11 {dimension_numbers = #tpu.dot_dimension_numbers<[1], [0], [0], [1], [0, 0, 1, 1], [], []>} : vector<8x128xf32>, vector<128x128xf32>, vector<8x128xf32> -> vector<8x128xf32>
    %13 = vector.broadcast %11 : vector<1x128xf32> to vector<8x128xf32>
    %14 = arith.addf %12, %13 : vector<8x128xf32>
    %cst_12 = arith.constant 0.000000e+00 : f32
    %cst_13 = arith.constant 1.000000e+00 : f32
    %15 = vector.broadcast %cst_12 : f32 to vector<8x128xf32>
    %16 = arith.maximumf %15, %14 : vector<8x128xf32>
    %17 = vector.broadcast %cst_13 : f32 to vector<8x128xf32>
    %18 = arith.minimumf %17, %16 : vector<8x128xf32>
    %c1_i32 = arith.constant 1 : i32
    %cst_14 = arith.constant dense<0.000000e+00> : vector<8x128xf32>
    %19 = tpu.matmul %18, %10, %cst_14 {dimension_numbers = #tpu.dot_dimension_numbers<[1], [0], [0], [1], [0, 0, 1, 1], [], []>} : vector<8x128xf32>, vector<128x128xf32>, vector<8x128xf32> -> vector<8x128xf32>
    %20 = vector.broadcast %11 : vector<1x128xf32> to vector<8x128xf32>
    %21 = arith.addf %19, %20 : vector<8x128xf32>
    %cst_15 = arith.constant 0.000000e+00 : f32
    %cst_16 = arith.constant 1.000000e+00 : f32
    %22 = vector.broadcast %cst_15 : f32 to vector<8x128xf32>
    %23 = arith.maximumf %22, %21 : vector<8x128xf32>
    %24 = vector.broadcast %cst_16 : f32 to vector<8x128xf32>
    %25 = arith.minimumf %24, %23 : vector<8x128xf32>
    %c2_i32 = arith.constant 2 : i32
    %cst_17 = arith.constant dense<0.000000e+00> : vector<8x128xf32>
    %26 = tpu.matmul %25, %10, %cst_17 {dimension_numbers = #tpu.dot_dimension_numbers<[1], [0], [0], [1], [0, 0, 1, 1], [], []>} : vector<8x128xf32>, vector<128x128xf32>, vector<8x128xf32> -> vector<8x128xf32>
    %27 = vector.broadcast %11 : vector<1x128xf32> to vector<8x128xf32>
    %28 = arith.addf %26, %27 : vector<8x128xf32>
    %cst_18 = arith.constant 0.000000e+00 : f32
    %cst_19 = arith.constant 1.000000e+00 : f32
    %29 = vector.broadcast %cst_18 : f32 to vector<8x128xf32>
    %30 = arith.maximumf %29, %28 : vector<8x128xf32>
    %31 = vector.broadcast %cst_19 : f32 to vector<8x128xf32>
    %32 = arith.minimumf %31, %30 : vector<8x128xf32>
    %c0_20 = arith.constant 0 : index
    %c0_21 = arith.constant 0 : index
    %33 = vector.load %arg6[%c0_20, %c0_21] : memref<128x8xf32, #tpu.memory_space<vmem>>, vector<128x8xf32>
    %cst_22 = arith.constant dense<0.000000e+00> : vector<8x8xf32>
    %34 = tpu.matmul %32, %33, %cst_22 {dimension_numbers = #tpu.dot_dimension_numbers<[1], [0], [0], [1], [0, 0, 1, 1], [], []>} : vector<8x128xf32>, vector<128x8xf32>, vector<8x8xf32> -> vector<8x8xf32>
    %c0_23 = arith.constant 0 : index
    %c0_24 = arith.constant 0 : index
    %35 = vector.load %arg7[%c0_23, %c0_24] : memref<1x8xf32, #tpu.memory_space<vmem>>, vector<1x8xf32>
    %36 = vector.broadcast %35 : vector<1x8xf32> to vector<8x8xf32>
    %37 = arith.addf %34, %36 : vector<8x8xf32>
    %c0_25 = arith.constant 0 : index
    %c0_26 = arith.constant 0 : index
    %38 = vector.load %arg8[%c0_25, %c0_26] : memref<8x8xf32, #tpu.memory_space<vmem>>, vector<8x8xf32>
    tpu.vector_store %arg8[%c0_25, %c0_26], %37 {strides = array<i32>} : memref<8x8xf32, #tpu.memory_space<vmem>>, vector<8x8xf32>,
    return
  }
  func.func @transform_0(%arg0: i32) -> (i32, i32) {
    %c0_i32 = arith.constant 0 : i32
    %c0_i32_0 = arith.constant 0 : i32
    return %arg0, %c0_i32 : i32, i32
  }
  func.func @transform_1(%arg0: i32) -> (i32, i32) {
    %c0_i32 = arith.constant 0 : i32
    %c0_i32_0 = arith.constant 0 : i32
    %c0_i32_1 = arith.constant 0 : i32
    return %c0_i32, %c0_i32_0 : i32, i32
  }
  func.func @transform_2(%arg0: i32) -> (i32, i32) {
    %c0_i32 = arith.constant 0 : i32
    %c0_i32_0 = arith.constant 0 : i32
    %c0_i32_1 = arith.constant 0 : i32
    return %c0_i32, %c0_i32_0 : i32, i32
  }
  func.func @transform_3(%arg0: i32) -> (i32, i32) {
    %c0_i32 = arith.constant 0 : i32
    %c0_i32_0 = arith.constant 0 : i32
    %c0_i32_1 = arith.constant 0 : i32
    return %c0_i32, %c0_i32_0 : i32, i32
  }
  func.func @transform_4(%arg0: i32) -> (i32, i32) {
    %c0_i32 = arith.constant 0 : i32
    %c0_i32_0 = arith.constant 0 : i32
    %c0_i32_1 = arith.constant 0 : i32
    return %c0_i32, %c0_i32_0 : i32, i32
  }
  func.func @transform_5(%arg0: i32) -> (i32, i32) {
    %c0_i32 = arith.constant 0 : i32
    %c0_i32_0 = arith.constant 0 : i32
    %c0_i32_1 = arith.constant 0 : i32
    return %c0_i32, %c0_i32_0 : i32, i32
  }
  func.func @transform_6(%arg0: i32) -> (i32, i32) {
    %c0_i32 = arith.constant 0 : i32
    %c0_i32_0 = arith.constant 0 : i32
    %c0_i32_1 = arith.constant 0 : i32
    return %c0_i32, %c0_i32_0 : i32, i32
  }
  func.func @transform_7(%arg0: i32) -> (i32, i32) {
    %c0_i32 = arith.constant 0 : i32
    %c0_i32_0 = arith.constant 0 : i32
    return %arg0, %c0_i32 : i32, i32
  }
}

</mosaic_0001>

<llo_original>
// kernel: tpu_custom_call.1
$region0: #{tpu_custom_call.1}
  #allocation0 [shape = 'u32[]', space=smem, size = 0x4, offset = 0x4, fixed_abs, tag = 'smem constant byte address 0x4 - core index']
  #allocation1 [shape = 'u32[144,128]{1,0:T(1,128)}', space=vmem, size = 0x12000, scoped, tag = 'internal scratch']
  %s0 = inlined_call_operand.vmem [shape: f32[8,32], index: 0, kind: input, shape index: {}]
  %s1 = inlined_call_operand.hbm [shape: f32[32,128], index: 1, kind: input, shape index: {}]
  %s2 = inlined_call_operand.vmem [shape: f32[1,128], index: 2, kind: input, shape index: {}]
  %s3 = inlined_call_operand.vmem [shape: f32[128,128], index: 3, kind: input, shape index: {}]
  %s4 = inlined_call_operand.vmem [shape: f32[1,128], index: 4, kind: input, shape index: {}]
  %s5 = inlined_call_operand.vmem [shape: f32[128,8], index: 5, kind: input, shape index: {}]
  %s6 = inlined_call_operand.vmem [shape: f32[1,8], index: 6, kind: input, shape index: {}]
  %s7 = inlined_call_operand.hbm [shape: f32[8,8], index: 7, kind: output, shape index: {}]
  %s8 = sld [smem:[#allocation0]]
  $region42: #{tpu_custom_call.1} parent=0
    _
  %s10 = ssub.s32 1, %s8
  %s11 = scalar_select 0, %s10, %s8
  $region1: #{tpu_custom_call.1} parent=0
    #allocation2 [shape = 'u8[16384]{0}', space=vmem, size = 0x4000, scoped, tag = 'input window, operand 1, single buffered']
    #allocation3 [shape = 's32[1]{0}', space=sflag, size = 0x4, scoped, tag = 'scoped memory for tpu_custom_call.1']
    #allocation4 [shape = 's32[1]{0}', space=sflag, size = 0x4, scoped, tag = 'scoped memory for tpu_custom_call.1']
    #allocation5 [shape = 'u8[4096]{0}', space=vmem, size = 0x1000, scoped, tag = 'output window, operand 0, single buffered']
    %12 = vsyncpa [#allocation3], 0
    %13 = vsyncpa [#allocation4], 0
    // Predicated region
    $region2: #{tpu_custom_call.1} parent=1 // pred_check
      _
    $region3: #{tpu_custom_call.1} parent=1 // pred_check_branch
      %15 = sbr.rel (0) target = $region5
    $region4: #{tpu_custom_call.1} parent=1 // pred_region
      _
    $region5: #{tpu_custom_call.1} parent=1 // pred_fallthru
      _
    // Predicated region
    $region6: #{tpu_custom_call.1} parent=1 // pred_check
      _
    $region7: #{tpu_custom_call.1} parent=1 // pred_check_branch
      %17 = sbr.rel (0) target = $region9
    $region8: #{tpu_custom_call.1} parent=1 // pred_region
      %s19 = ssub.s32 512, 512
      %20 = vsyncadd [#allocation3], %s19
      %s21 = sshll.u32 [#allocation2], 4
      %s22 = int_to_ptr.vmem [resolvable:$true] %s21
      %27 = dma.hbm_to_vmem [thread:$0]  %s1, 512, %s22, [#allocation3], 128, 128, 8
    $region9: #{tpu_custom_call.1} parent=1 // pred_fallthru
      _
    // Predicated region
    $region10: #{tpu_custom_call.1} parent=1 // pred_check
      _
    $region11: #{tpu_custom_call.1} parent=1 // pred_check_branch
      %29 = sbr.rel (0) target = $region13
    $region12: #{tpu_custom_call.1} parent=1 // pred_region
      _
    $region13: #{tpu_custom_call.1} parent=1 // pred_fallthru
      _
    // Predicated region
    $region14: #{tpu_custom_call.1} parent=1 // pred_check
      _
    $region15: #{tpu_custom_call.1} parent=1 // pred_check_branch
      %31 = sbr.rel (0) target = $region17
    $region16: #{tpu_custom_call.1} parent=1 // pred_region
      _
    $region17: #{tpu_custom_call.1} parent=1 // pred_fallthru
      _
    // Predicated region
    $region18: #{tpu_custom_call.1} parent=1 // pred_check
      _
    $region19: #{tpu_custom_call.1} parent=1 // pred_check_branch
      %33 = sbr.rel (0) target = $region21
    $region20: #{tpu_custom_call.1} parent=1 // pred_region
      _
    $region21: #{tpu_custom_call.1} parent=1 // pred_fallthru
      _
    // Predicated region
    $region22: #{tpu_custom_call.1} parent=1 // pred_check
      _
    $region23: #{tpu_custom_call.1} parent=1 // pred_check_branch
      %35 = sbr.rel (0) target = $region25
    $region24: #{tpu_custom_call.1} parent=1 // pred_region
      _
    $region25: #{tpu_custom_call.1} parent=1 // pred_fallthru
      _
    // Predicated region
    $region26: #{tpu_custom_call.1} parent=1 // pred_check
      _
    $region27: #{tpu_custom_call.1} parent=1 // pred_check_branch
      %37 = sbr.rel (0) target = $region29
    $region28: #{tpu_custom_call.1} parent=1 // pred_region
      _
    $region29: #{tpu_custom_call.1} parent=1 // pred_fallthru
      _
    // Predicated region
    $region30: #{tpu_custom_call.1} parent=1 // pred_check
      _
    $region31: #{tpu_custom_call.1} parent=1 // pred_check_branch
      %39 = sbr.rel (0) target = $region33
    $region32: #{tpu_custom_call.1} parent=1 // pred_region
      %40 = dma.done [#allocation3], 512
    $region33: #{tpu_custom_call.1} parent=1 // pred_fallthru
      _
    %v41 = vld [vmem:[%s0] sm:$0xff]
    %v42 = vld [vmem:[#allocation2] sm:$0xff]
    %v43 = vld [vmem:[#allocation2 + $0x8] sm:$0xff]
    %v44 = vld [vmem:[#allocation2 + $0x10] sm:$0xff]
    %v45 = vld [vmem:[#allocation2 + $0x18] sm:$0xff]
    %v46 = vld [vmem:[%s2] sm:$0x1]
    %v48 = vlaneseq
    %v49 = vshrl.u32 %v48, 7
    %v50 = vsub.s32 0, %v49
    %v51 = vrot.slane %v46, %v50
    %vm53 = vcmask 261120
    %v55 = vsel %vm53, %v41, 0
    %57 = vmatprep.subr.mxu0 0.0
    %58 = vmatpush1.msra.mxu0 %v42
    %59 = vmatprep.subr.mxu0 0.0
    %60 = vmatpush1.msra.mxu0 %v43
    %61 = vmatprep.subr.mxu0 0.0
    %62 = vmatpush1.msra.mxu0 %v44
    %63 = vmatprep.subr.mxu0 0.0
    %64 = vmatpush1.msra.mxu0 %v45
    %65 = vmatprep.subr.mxu0 0.0
    %66 = vmatpush1.msra.mxu0 0.0
    %67 = vmatprep.subr.mxu0 0.0
    %68 = vmatpush1.msra.mxu0 0.0
    %69 = vmatprep.subr.mxu0 0.0
    %70 = vmatpush1.msra.mxu0 0.0
    %71 = vmatprep.subr.mxu0 0.0
    %72 = vmatpush1.msra.mxu0 0.0
    %73 = vmatprep.subr.mxu0 0.0
    %74 = vmatpush1.msra.mxu0 0.0
    %75 = vmatprep.subr.mxu0 0.0
    %76 = vmatpush1.msra.mxu0 0.0
    %77 = vmatprep.subr.mxu0 0.0
    %78 = vmatpush1.msra.mxu0 0.0
    %79 = vmatprep.subr.mxu0 0.0
    %80 = vmatpush1.msra.mxu0 0.0
    %81 = vmatprep.subr.mxu0 0.0
    %82 = vmatpush1.msra.mxu0 0.0
    %83 = vmatprep.subr.mxu0 0.0
    %84 = vmatpush1.msra.mxu0 0.0
    %85 = vmatprep.subr.mxu0 0.0
    %86 = vmatpush1.msra.mxu0 0.0
    %87 = vmatprep.subr.mxu0 0.0
    %88 = vmatpush1.msra.mxu0 0.0
    %89 = vmatprep.subr.mxu0 0.0
    %90 = vmatpush1.msra.mxu0 0.0
    %91 = vmatprep.subr.mxu0 0.0
    %92 = vmatpush1.msra.mxu0 0.0
    %93 = vmatprep.subr.mxu0 0.0
    %94 = vmatpush1.msra.mxu0 0.0
    %95 = vmatprep.subr.mxu0 0.0
    %96 = vmatpush1.msra.mxu0 0.0
    %97 = vmatprep.subr.mxu0 0.0
    %98 = vmatpush1.msra.mxu0 0.0
    %99 = vmatprep.subr.mxu0 0.0
    %100 = vmatpush1.msra.mxu0 0.0
    %101 = vmatprep.subr.mxu0 0.0
    %102 = vmatpush1.msra.mxu0 0.0
    %103 = vmatprep.subr.mxu0 0.0
    %104 = vmatpush1.msra.mxu0 0.0
    %105 = vmatprep.subr.mxu0 0.0
    %106 = vmatpush1.msra.mxu0 0.0
    %107 = vmatprep.subr.mxu0 0.0
    %108 = vmatpush1.msra.mxu0 0.0
    %109 = vmatprep.subr.mxu0 0.0
    %110 = vmatpush1.msra.mxu0 0.0
    %111 = vmatprep.subr.mxu0 0.0
    %112 = vmatpush1.msra.mxu0 0.0
    %113 = vmatprep.subr.mxu0 0.0
    %114 = vmatpush1.msra.mxu0 0.0
    %115 = vmatprep.subr.mxu0 0.0
    %116 = vmatpush1.msra.mxu0 0.0
    %117 = vmatprep.subr.mxu0 0.0
    %118 = vmatpush1.msra.mxu0 0.0
    %119 = vmatprep.subr.mxu0 0.0
    %120 = vmatpush1.msra.mxu0 0.0
    %121 = vmatprep.mubr.f32.mxu0 0.0
    %122 = vmatmul.mubr.f32.gmra.mrb[0].mxu0 %v55
    %v123 = vpop.f32.mrb[0].mxu0
    %v124 = vadd.f32 %v51, %v123
    %v125 = vpop.f32.mrb[0].mxu0
    %126 = vdwg.mxu0
    %v127 = vmax.f32 %v124, 0.0
    %v128 = vmin.f32 %v127, 1.0
    %v129 = vld [vmem:[%s3] sm:$0xff]
    %v130 = vld [vmem:[%s3 + $0x8] sm:$0xff]
    %v131 = vld [vmem:[%s3 + $0x10] sm:$0xff]
    %v132 = vld [vmem:[%s3 + $0x18] sm:$0xff]
    %v133 = vld [vmem:[%s3 + $0x20] sm:$0xff]
    %v134 = vld [vmem:[%s3 + $0x28] sm:$0xff]
    %v135 = vld [vmem:[%s3 + $0x30] sm:$0xff]
    %v136 = vld [vmem:[%s3 + $0x38] sm:$0xff]
    %v137 = vld [vmem:[%s3 + $0x40] sm:$0xff]
    %v138 = vld [vmem:[%s3 + $0x48] sm:$0xff]
    %v139 = vld [vmem:[%s3 + $0x50] sm:$0xff]
    %v140 = vld [vmem:[%s3 + $0x58] sm:$0xff]
    %v141 = vld [vmem:[%s3 + $0x60] sm:$0xff]
    %v142 = vld [vmem:[%s3 + $0x68] sm:$0xff]
    %v143 = vld [vmem:[%s3 + $0x70] sm:$0xff]
    %v144 = vld [vmem:[%s3 + $0x78] sm:$0xff]
    %v145 = vld [vmem:[%s4] sm:$0x1]
    %v147 = vlaneseq
    %v148 = vshrl.u32 %v147, 7
    %v149 = vsub.s32 0, %v148
    %v150 = vrot.slane %v145, %v149
    %152 = vmatprep.subr.mxu0 0.0
    %153 = vmatpush1.msra.mxu0 %v129
    %154 = vmatprep.subr.mxu0 0.0
    %155 = vmatpush1.msra.mxu0 %v130
    %156 = vmatprep.subr.mxu0 0.0
    %157 = vmatpush1.msra.mxu0 %v131
    %158 = vmatprep.subr.mxu0 0.0
    %159 = vmatpush1.msra.mxu0 %v132
    %160 = vmatprep.subr.mxu0 0.0
    %161 = vmatpush1.msra.mxu0 %v133
    %162 = vmatprep.subr.mxu0 0.0
    %163 = vmatpush1.msra.mxu0 %v134
    %164 = vmatprep.subr.mxu0 0.0
    %165 = vmatpush1.msra.mxu0 %v135
    %166 = vmatprep.subr.mxu0 0.0
    %167 = vmatpush1.msra.mxu0 %v136
    %168 = vmatprep.subr.mxu0 0.0
    %169 = vmatpush1.msra.mxu0 %v137
    %170 = vmatprep.subr.mxu0 0.0
    %171 = vmatpush1.msra.mxu0 %v138
    %172 = vmatprep.subr.mxu0 0.0
    %173 = vmatpush1.msra.mxu0 %v139
    %174 = vmatprep.subr.mxu0 0.0
    %175 = vmatpush1.msra.mxu0 %v140
    %176 = vmatprep.subr.mxu0 0.0
    %177 = vmatpush1.msra.mxu0 %v141
    %178 = vmatprep.subr.mxu0 0.0
    %179 = vmatpush1.msra.mxu0 %v142
    %180 = vmatprep.subr.mxu0 0.0
    %181 = vmatpush1.msra.mxu0 %v143
    %182 = vmatprep.subr.mxu0 0.0
    %183 = vmatpush1.msra.mxu0 %v144
    %184 = vmatprep.subr.mxu0 0.0
    %185 = vmatpush1.msra.mxu0 0.0
    %186 = vmatprep.subr.mxu0 0.0
    %187 = vmatpush1.msra.mxu0 0.0
    %188 = vmatprep.subr.mxu0 0.0
    %189 = vmatpush1.msra.mxu0 0.0
    %190 = vmatprep.subr.mxu0 0.0
    %191 = vmatpush1.msra.mxu0 0.0
    %192 = vmatprep.subr.mxu0 0.0
    %193 = vmatpush1.msra.mxu0 0.0
    %194 = vmatprep.subr.mxu0 0.0
    %195 = vmatpush1.msra.mxu0 0.0
    %196 = vmatprep.subr.mxu0 0.0
    %197 = vmatpush1.msra.mxu0 0.0
    %198 = vmatprep.subr.mxu0 0.0
    %199 = vmatpush1.msra.mxu0 0.0
    %200 = vmatprep.subr.mxu0 0.0
    %201 = vmatpush1.msra.mxu0 0.0
    %202 = vmatprep.subr.mxu0 0.0
    %203 = vmatpush1.msra.mxu0 0.0
    %204 = vmatprep.subr.mxu0 0.0
    %205 = vmatpush1.msra.mxu0 0.0
    %206 = vmatprep.subr.mxu0 0.0
    %207 = vmatpush1.msra.mxu0 0.0
    %208 = vmatprep.subr.mxu0 0.0
    %209 = vmatpush1.msra.mxu0 0.0
    %210 = vmatprep.subr.mxu0 0.0
    %211 = vmatpush1.msra.mxu0 0.0
    %212 = vmatprep.subr.mxu0 0.0
    %213 = vmatpush1.msra.mxu0 0.0
    %214 = vmatprep.subr.mxu0 0.0
    %215 = vmatpush1.msra.mxu0 0.0
    %216 = vmatprep.mubr.f32.mxu0 0.0
    %217 = vmatmul.mubr.f32.gmra.mrb[0].mxu0 %v128
    %v218 = vpop.f32.mrb[0].mxu0
    %v219 = vadd.f32 %v150, %v218
    %v220 = vpop.f32.mrb[0].mxu0
    %221 = vdwg.mxu0
    %v222 = vmax.f32 %v219, 0.0
    %v223 = vmin.f32 %v222, 1.0
    %224 = vmatprep.subr.mxu0 0.0
    %225 = vmatpush1.msra.mxu0 %v129
    %226 = vmatprep.subr.mxu0 0.0
    %227 = vmatpush1.msra.mxu0 %v130
    %228 = vmatprep.subr.mxu0 0.0
    %229 = vmatpush1.msra.mxu0 %v131
    %230 = vmatprep.subr.mxu0 0.0
    %231 = vmatpush1.msra.mxu0 %v132
    %232 = vmatprep.subr.mxu0 0.0
    %233 = vmatpush1.msra.mxu0 %v133
    %234 = vmatprep.subr.mxu0 0.0
    %235 = vmatpush1.msra.mxu0 %v134
    %236 = vmatprep.subr.mxu0 0.0
    %237 = vmatpush1.msra.mxu0 %v135
    %238 = vmatprep.subr.mxu0 0.0
    %239 = vmatpush1.msra.mxu0 %v136
    %240 = vmatprep.subr.mxu0 0.0
    %241 = vmatpush1.msra.mxu0 %v137
    %242 = vmatprep.subr.mxu0 0.0
    %243 = vmatpush1.msra.mxu0 %v138
    %244 = vmatprep.subr.mxu0 0.0
    %245 = vmatpush1.msra.mxu0 %v139
    %246 = vmatprep.subr.mxu0 0.0
    %247 = vmatpush1.msra.mxu0 %v140
    %248 = vmatprep.subr.mxu0 0.0
    %249 = vmatpush1.msra.mxu0 %v141
    %250 = vmatprep.subr.mxu0 0.0
    %251 = vmatpush1.msra.mxu0 %v142
    %252 = vmatprep.subr.mxu0 0.0
    %253 = vmatpush1.msra.mxu0 %v143
    %254 = vmatprep.subr.mxu0 0.0
    %255 = vmatpush1.msra.mxu0 %v144
    %256 = vmatprep.subr.mxu0 0.0
    %257 = vmatpush1.msra.mxu0 0.0
    %258 = vmatprep.subr.mxu0 0.0
    %259 = vmatpush1.msra.mxu0 0.0
    %260 = vmatprep.subr.mxu0 0.0
    %261 = vmatpush1.msra.mxu0 0.0
    %262 = vmatprep.subr.mxu0 0.0
    %263 = vmatpush1.msra.mxu0 0.0
    %264 = vmatprep.subr.mxu0 0.0
    %265 = vmatpush1.msra.mxu0 0.0
    %266 = vmatprep.subr.mxu0 0.0
    %267 = vmatpush1.msra.mxu0 0.0
    %268 = vmatprep.subr.mxu0 0.0
    %269 = vmatpush1.msra.mxu0 0.0
    %270 = vmatprep.subr.mxu0 0.0
    %271 = vmatpush1.msra.mxu0 0.0
    %272 = vmatprep.subr.mxu0 0.0
    %273 = vmatpush1.msra.mxu0 0.0
    %274 = vmatprep.subr.mxu0 0.0
    %275 = vmatpush1.msra.mxu0 0.0
    %276 = vmatprep.subr.mxu0 0.0
    %277 = vmatpush1.msra.mxu0 0.0
    %278 = vmatprep.subr.mxu0 0.0
    %279 = vmatpush1.msra.mxu0 0.0
    %280 = vmatprep.subr.mxu0 0.0
    %281 = vmatpush1.msra.mxu0 0.0
    %282 = vmatprep.subr.mxu0 0.0
    %283 = vmatpush1.msra.mxu0 0.0
    %284 = vmatprep.subr.mxu0 0.0
    %285 = vmatpush1.msra.mxu0 0.0
    %286 = vmatprep.subr.mxu0 0.0
    %287 = vmatpush1.msra.mxu0 0.0
    %288 = vmatprep.mubr.f32.mxu0 0.0
    %289 = vmatmul.mubr.f32.gmra.mrb[0].mxu0 %v223
    %v290 = vpop.f32.mrb[0].mxu0
    %v291 = vadd.f32 %v150, %v290
    %v292 = vpop.f32.mrb[0].mxu0
    %293 = vdwg.mxu0
    %v294 = vmax.f32 %v291, 0.0
    %v295 = vmin.f32 %v294, 1.0
    %296 = vmatprep.subr.mxu0 0.0
    %297 = vmatpush1.msra.mxu0 %v129
    %298 = vmatprep.subr.mxu0 0.0
    %299 = vmatpush1.msra.mxu0 %v130
    %300 = vmatprep.subr.mxu0 0.0
    %301 = vmatpush1.msra.mxu0 %v131
    %302 = vmatprep.subr.mxu0 0.0
    %303 = vmatpush1.msra.mxu0 %v132
    %304 = vmatprep.subr.mxu0 0.0
    %305 = vmatpush1.msra.mxu0 %v133
    %306 = vmatprep.subr.mxu0 0.0
    %307 = vmatpush1.msra.mxu0 %v134
    %308 = vmatprep.subr.mxu0 0.0
    %309 = vmatpush1.msra.mxu0 %v135
    %310 = vmatprep.subr.mxu0 0.0
    %311 = vmatpush1.msra.mxu0 %v136
    %312 = vmatprep.subr.mxu0 0.0
    %313 = vmatpush1.msra.mxu0 %v137
    %314 = vmatprep.subr.mxu0 0.0
    %315 = vmatpush1.msra.mxu0 %v138
    %316 = vmatprep.subr.mxu0 0.0
    %317 = vmatpush1.msra.mxu0 %v139
    %318 = vmatprep.subr.mxu0 0.0
    %319 = vmatpush1.msra.mxu0 %v140
    %320 = vmatprep.subr.mxu0 0.0
    %321 = vmatpush1.msra.mxu0 %v141
    %322 = vmatprep.subr.mxu0 0.0
    %323 = vmatpush1.msra.mxu0 %v142
    %324 = vmatprep.subr.mxu0 0.0
    %325 = vmatpush1.msra.mxu0 %v143
    %326 = vmatprep.subr.mxu0 0.0
    %327 = vmatpush1.msra.mxu0 %v144
    %328 = vmatprep.subr.mxu0 0.0
    %329 = vmatpush1.msra.mxu0 0.0
    %330 = vmatprep.subr.mxu0 0.0
    %331 = vmatpush1.msra.mxu0 0.0
    %332 = vmatprep.subr.mxu0 0.0
    %333 = vmatpush1.msra.mxu0 0.0
    %334 = vmatprep.subr.mxu0 0.0
    %335 = vmatpush1.msra.mxu0 0.0
    %336 = vmatprep.subr.mxu0 0.0
    %337 = vmatpush1.msra.mxu0 0.0
    %338 = vmatprep.subr.mxu0 0.0
    %339 = vmatpush1.msra.mxu0 0.0
    %340 = vmatprep.subr.mxu0 0.0
    %341 = vmatpush1.msra.mxu0 0.0
    %342 = vmatprep.subr.mxu0 0.0
    %343 = vmatpush1.msra.mxu0 0.0
    %344 = vmatprep.subr.mxu0 0.0
    %345 = vmatpush1.msra.mxu0 0.0
    %346 = vmatprep.subr.mxu0 0.0
    %347 = vmatpush1.msra.mxu0 0.0
    %348 = vmatprep.subr.mxu0 0.0
    %349 = vmatpush1.msra.mxu0 0.0
    %350 = vmatprep.subr.mxu0 0.0
    %351 = vmatpush1.msra.mxu0 0.0
    %352 = vmatprep.subr.mxu0 0.0
    %353 = vmatpush1.msra.mxu0 0.0
    %354 = vmatprep.subr.mxu0 0.0
    %355 = vmatpush1.msra.mxu0 0.0
    %356 = vmatprep.subr.mxu0 0.0
    %357 = vmatpush1.msra.mxu0 0.0
    %358 = vmatprep.subr.mxu0 0.0
    %359 = vmatpush1.msra.mxu0 0.0
    %360 = vmatprep.mubr.f32.mxu0 0.0
    %361 = vmatmul.mubr.f32.gmra.mrb[0].mxu0 %v295
    %v362 = vpop.f32.mrb[0].mxu0
    %v363 = vadd.f32 %v150, %v362
    %v364 = vpop.f32.mrb[0].mxu0
    %365 = vdwg.mxu0
    %v366 = vmax.f32 %v363, 0.0
    %v367 = vmin.f32 %v366, 1.0
    %v368 = vld [vmem:[%s5] sm:$0xff]
    %v369 = vld [vmem:[%s5 + $0x8] sm:$0xff]
    %v370 = vld [vmem:[%s5 + $0x10] sm:$0xff]
    %v371 = vld [vmem:[%s5 + $0x18] sm:$0xff]
    %v372 = vld [vmem:[%s5 + $0x20] sm:$0xff]
    %v373 = vld [vmem:[%s5 + $0x28] sm:$0xff]
    %v374 = vld [vmem:[%s5 + $0x30] sm:$0xff]
    %v375 = vld [vmem:[%s5 + $0x38] sm:$0xff]
    %v376 = vld [vmem:[%s5 + $0x40] sm:$0xff]
    %v377 = vld [vmem:[%s5 + $0x48] sm:$0xff]
    %v378 = vld [vmem:[%s5 + $0x50] sm:$0xff]
    %v379 = vld [vmem:[%s5 + $0x58] sm:$0xff]
    %v380 = vld [vmem:[%s5 + $0x60] sm:$0xff]
    %v381 = vld [vmem:[%s5 + $0x68] sm:$0xff]
    %v382 = vld [vmem:[%s5 + $0x70] sm:$0xff]
    %v383 = vld [vmem:[%s5 + $0x78] sm:$0xff]
    %v384 = vld [vmem:[%s6] sm:$0x1]
    %v386 = vlaneseq
    %v387 = vshrl.u32 %v386, 7
    %v388 = vsub.s32 0, %v387
    %v389 = vrot.slane %v384, %v388
    %391 = vmatprep.subr.mxu0 0.0
    %392 = vmatpush1.msra.mxu0 %v368
    %393 = vmatprep.subr.mxu0 0.0
    %394 = vmatpush1.msra.mxu0 %v369
    %395 = vmatprep.subr.mxu0 0.0
    %396 = vmatpush1.msra.mxu0 %v370
    %397 = vmatprep.subr.mxu0 0.0
    %398 = vmatpush1.msra.mxu0 %v371
    %399 = vmatprep.subr.mxu0 0.0
    %400 = vmatpush1.msra.mxu0 %v372
    %401 = vmatprep.subr.mxu0 0.0
    %402 = vmatpush1.msra.mxu0 %v373
    %403 = vmatprep.subr.mxu0 0.0
    %404 = vmatpush1.msra.mxu0 %v374
    %405 = vmatprep.subr.mxu0 0.0
    %406 = vmatpush1.msra.mxu0 %v375
    %407 = vmatprep.subr.mxu0 0.0
    %408 = vmatpush1.msra.mxu0 %v376
    %409 = vmatprep.subr.mxu0 0.0
    %410 = vmatpush1.msra.mxu0 %v377
    %411 = vmatprep.subr.mxu0 0.0
    %412 = vmatpush1.msra.mxu0 %v378
    %413 = vmatprep.subr.mxu0 0.0
    %414 = vmatpush1.msra.mxu0 %v379
    %415 = vmatprep.subr.mxu0 0.0
    %416 = vmatpush1.msra.mxu0 %v380
    %417 = vmatprep.subr.mxu0 0.0
    %418 = vmatpush1.msra.mxu0 %v381
    %419 = vmatprep.subr.mxu0 0.0
    %420 = vmatpush1.msra.mxu0 %v382
    %421 = vmatprep.subr.mxu0 0.0
    %422 = vmatpush1.msra.mxu0 %v383
    %423 = vmatprep.subr.mxu0 0.0
    %424 = vmatpush1.msra.mxu0 0.0
    %425 = vmatprep.subr.mxu0 0.0
    %426 = vmatpush1.msra.mxu0 0.0
    %427 = vmatprep.subr.mxu0 0.0
    %428 = vmatpush1.msra.mxu0 0.0
    %429 = vmatprep.subr.mxu0 0.0
    %430 = vmatpush1.msra.mxu0 0.0
    %431 = vmatprep.subr.mxu0 0.0
    %432 = vmatpush1.msra.mxu0 0.0
    %433 = vmatprep.subr.mxu0 0.0
    %434 = vmatpush1.msra.mxu0 0.0
    %435 = vmatprep.subr.mxu0 0.0
    %436 = vmatpush1.msra.mxu0 0.0
    %437 = vmatprep.subr.mxu0 0.0
    %438 = vmatpush1.msra.mxu0 0.0
    %439 = vmatprep.subr.mxu0 0.0
    %440 = vmatpush1.msra.mxu0 0.0
    %441 = vmatprep.subr.mxu0 0.0
    %442 = vmatpush1.msra.mxu0 0.0
    %443 = vmatprep.subr.mxu0 0.0
    %444 = vmatpush1.msra.mxu0 0.0
    %445 = vmatprep.subr.mxu0 0.0
    %446 = vmatpush1.msra.mxu0 0.0
    %447 = vmatprep.subr.mxu0 0.0
    %448 = vmatpush1.msra.mxu0 0.0
    %449 = vmatprep.subr.mxu0 0.0
    %450 = vmatpush1.msra.mxu0 0.0
    %451 = vmatprep.subr.mxu0 0.0
    %452 = vmatpush1.msra.mxu0 0.0
    %453 = vmatprep.subr.mxu0 0.0
    %454 = vmatpush1.msra.mxu0 0.0
    %455 = vmatprep.mubr.f32.mxu0 0.0
    %456 = vmatmul.mubr.f32.gmra.mrb[0].mxu0 %v367
    %v457 = vpop.f32.mrb[0].mxu0
    %v458 = vadd.f32 %v389, %v457
    %v459 = vpop.f32.mrb[0].mxu0
    %460 = vdwg.mxu0
    %vm461 = vcmask 64512
    %462 = vst.msk [vmem:[#allocation5] sm:$0xff] %vm461, %v458
    // Predicated region
    $region34: #{tpu_custom_call.1} parent=1 // pred_check
      _
    $region35: #{tpu_custom_call.1} parent=1 // pred_check_branch
      %464 = sbr.rel (0) target = $region37
    $region36: #{tpu_custom_call.1} parent=1 // pred_region
      %s466 = ssub.s32 128, 128
      %467 = vsyncadd [#allocation4], %s466
      %s469 = sshll.u32 [#allocation5], 4
      %s470 = int_to_ptr.vmem [resolvable:$true] %s469
      %472 = dma.vmem_to_hbm [thread:$0]  %s470, 128, %s7, [#allocation4]
    $region37: #{tpu_custom_call.1} parent=1 // pred_fallthru
      _
    // Predicated region
    $region38: #{tpu_custom_call.1} parent=1 // pred_check
      _
    $region39: #{tpu_custom_call.1} parent=1 // pred_check_branch
      %474 = sbr.rel (0) target = $region41
    $region40: #{tpu_custom_call.1} parent=1 // pred_region
      %475 = dma.done [#allocation4], 128
    $region41: #{tpu_custom_call.1} parent=1 // pred_fallthru
      _
    %476 = vsyncpa [#allocation3], 1
    %477 = vsyncpa [#allocation4], 1

</llo_original>
